<compile_context>
chip_gen: v7x
topology: tpu7x:2x2x1
jax: 0.10.0
libtpu: 0.0.40
codegen_flags: <defaults>
</compile_context>

<pallas_src>
import functools

import jax
import jax.numpy as jnp
from jax import lax
from jax.experimental import pallas as pl
from jax.experimental.pallas import tpu as pltpu


def _tugl_kernel(scores_ref, unc_ref, labels_ref, tta_ref, cls_ref, out_ref,
                 *, alpha, beta, gamma, batch, block_b, exact_logs):
    # Widen to f32 in-kernel (cheap VPU casts hidden under the memory stall).
    s = scores_ref[...].astype(jnp.float32)       # (tb, T) accident probs
    u = unc_ref[...].astype(jnp.float32)          # (tb, T) uncertainty
    y = labels_ref[...].astype(jnp.float32)       # (tb, T) binary labels
    tta = tta_ref[...].astype(jnp.float32)        # (tb, T) time-to-accident
    c = cls_ref[...].astype(jnp.float32)          # (tb, 1) per-video class

    tb, t = s.shape

    one_minus_y = 1.0 - y
    one_minus_s = 1.0 - s

    # U_t = 1 - uncertainty^2
    u_t = 1.0 - u * u

    # Exponential time weighting.
    w = jnp.exp(-alpha * tta)

    # Log terms.  exact_logs=True reproduces the PyTorch module exactly
    # (BCE uses log(s)/log(1-s) clamped at -100; the RL term uses +1e-6).
    # exact_logs=False shares one log pair (<=~1e-6 relative perturbation of
    # the BCE term away from the clamp region).
    if gamma != 0.0 and not exact_logs:
        log_a = jnp.log(s + 1e-6)
        log_b = jnp.log(one_minus_s + 1e-6)
        log_s = jnp.maximum(log_a, -100.0)
        log_1ms = jnp.maximum(log_b, -100.0)
    else:
        log_s = jnp.maximum(jnp.log(s), -100.0)
        log_1ms = jnp.maximum(jnp.log(one_minus_s), -100.0)
        if gamma != 0.0:
            log_a = jnp.log(s + 1e-6)
            log_b = jnp.log(one_minus_s + 1e-6)

    # BCE (reduction='none') and exponential weighting by class.
    bce = -(y * log_s + one_minus_y * log_1ms)
    l_exp = bce * (c * w + (1.0 - c))

    per = l_exp

    # Contrastive term (only emitted when beta != 0 at trace time):
    # (mean(pos scores) - mean(neg scores))^2 per video, 0 if either set empty.
    # Binary labels -> pos = y; neg_cnt = T - pos_cnt; sum(s*neg)=sum(s)-sum(s*y).
    if beta != 0.0:
        pos_cnt = jnp.sum(y, axis=-1, keepdims=True)
        neg_cnt = float(t) - pos_cnt
        s_sum = jnp.sum(s, axis=-1, keepdims=True)
        sp_sum = jnp.sum(s * y, axis=-1, keepdims=True)
        pos_mean = sp_sum / jnp.maximum(pos_cnt, 1.0)
        neg_mean = (s_sum - sp_sum) / jnp.maximum(neg_cnt, 1.0)
        both = jnp.logical_and(pos_cnt > 0.0, neg_cnt > 0.0)
        l_cont = jnp.where(both, (pos_mean - neg_mean) ** 2, 0.0)   # (tb, 1)
        per = per + beta * l_cont

    per = u_t * per

    # RL-style term (only emitted when gamma != 0 at trace time).
    # rewards = 2y-1  ->  -rewards = 1-2y ;  1-rewards = 2*(1-y).
    if gamma != 0.0:
        l_rl = (1.0 - 2.0 * y) * log_a - 2.0 * one_minus_y * log_b
        per = per + gamma * l_rl

    row_mean = jnp.sum(per, axis=-1, keepdims=True) * (1.0 / t)     # (tb, 1)

    # Mask rows past the real batch (boundary tile may contain undefined data;
    # jnp.where selects 0.0 for those rows regardless of NaN/Inf).
    row_idx = (pl.program_id(0) * block_b
               + lax.broadcasted_iota(jnp.int32, (tb, 1), 0))
    row_mean = jnp.where(row_idx < batch, row_mean, 0.0)

    partial = jnp.sum(row_mean)   # partial sum of per-video means for this tile

    # Lane/sublane-dense (8, 128) output block: partial at [0, 0], zeros
    # elsewhere -> wrapper just sums everything (exact, adds only zeros).
    rr = lax.broadcasted_iota(jnp.int32, (8, 128), 0)
    cc = lax.broadcasted_iota(jnp.int32, (8, 128), 1)
    out_ref[...] = jnp.where((rr == 0) & (cc == 0), partial, 0.0)


def _scoped_vmem_budget():
    """Per-generation scoped-VMEM budget (bytes): ~64 MiB on 128 MiB parts
    (v5e/v6e), <=48 MiB on 64 MiB-per-TC parts (v7x)."""
    phys = 128 * 1024 * 1024
    try:
        info = pltpu.get_tpu_info()
        phys = int(getattr(info, "vmem_capacity_bytes", phys))
    except Exception:
        pass
    if phys <= 64 * 1024 * 1024:
        return 48 * 1024 * 1024
    return 64 * 1024 * 1024


def tugl_loss(accident_scores, uncertainty, labels, time_to_accident, cls,
              alpha=0.1, beta=0.0, gamma=0.0, block_b=512, exact_logs=True):
    """Pallas TPU implementation of TUGLLoss.forward. Returns a scalar f32."""
    B, T = accident_scores.shape
    cls2d = cls.reshape(B, 1)

    # --- tile-size selection -------------------------------------------------
    # Count the 5 double-buffered input blocks at their real dtype widths plus
    # live f32 intermediates; keep a couple of MiB of headroom under the
    # per-generation scoped-VMEM limit.
    scoped_limit = _scoped_vmem_budget()
    vmem_budget = scoped_limit - 2 * 1024 * 1024

    in_elem_bytes = (accident_scores.dtype.itemsize + uncertainty.dtype.itemsize
                     + labels.dtype.itemsize + time_to_accident.dtype.itemsize)
    # Fewer live f32 temporaries once beta/gamma specialize to zero.
    n_f32_tmp = 6 if (beta == 0.0 and gamma == 0.0) else 10
    bytes_per_row = (2 * in_elem_bytes * T                      # double-buffered inputs
                     + 2 * cls2d.dtype.itemsize                 # cls block
                     + n_f32_tmp * 4 * T)                       # f32 intermediates
    max_tb = max(8, vmem_budget // bytes_per_row)
    max_tb = max(8, (max_tb // 8) * 8)

    if B <= 8:
        tb = B
    else:
        tb = min(block_b, max_tb, (B // 8) * 8)
        tb = max(tb, 8)
        # Keep >= 4 grid steps when the batch allows it so the PARALLEL axis
        # feeds both TensorCores on 2-TC parts (v7x megacore).
        if B >= 32:
            tb_cap = max(8, ((pl.cdiv(B, 4) + 7) // 8) * 8)
            tb = min(tb, tb_cap)

    num_tiles = pl.cdiv(B, tb)

    kernel = functools.partial(_tugl_kernel,
                               alpha=float(alpha), beta=float(beta),
                               gamma=float(gamma), batch=B, block_b=tb,
                               exact_logs=bool(exact_logs))

    # Advisory cost estimate so XLA can overlap this call with neighbours.
    n_logs = 2 if (gamma == 0.0 or not exact_logs) else 4
    flops = (18 + (6 if beta != 0.0 else 0) + (6 if gamma != 0.0 else 0)) * B * T
    in_bytes = (accident_scores.nbytes + uncertainty.nbytes + labels.nbytes
                + time_to_accident.nbytes + cls2d.nbytes)
    cost = pl.CostEstimate(
        flops=flops,
        transcendentals=(1 + n_logs) * B * T,
        bytes_accessed=int(in_bytes) + int(num_tiles) * 8 * 128 * 4)

    partials = pl.pallas_call(
        kernel,
        out_shape=jax.ShapeDtypeStruct((num_tiles, 8, 128), jnp.float32),
        grid=(num_tiles,),
        in_specs=[
            pl.BlockSpec((tb, T), lambda i: (i, 0)),
            pl.BlockSpec((tb, T), lambda i: (i, 0)),
            pl.BlockSpec((tb, T), lambda i: (i, 0)),
            pl.BlockSpec((tb, T), lambda i: (i, 0)),
            pl.BlockSpec((tb, 1), lambda i: (i, 0)),
        ],
        out_specs=pl.BlockSpec((None, 8, 128), lambda i: (i, 0, 0)),
        compiler_params=pltpu.CompilerParams(
            dimension_semantics=(pltpu.PARALLEL,),
            vmem_limit_bytes=scoped_limit),
        cost_estimate=cost,
    )(accident_scores, uncertainty, labels, time_to_accident, cls2d)

    # Partial sums of per-video means -> global mean over videos.
    return jnp.sum(partials) / B


def tugl_loss_ref(accident_scores, uncertainty, labels, time_to_accident, cls,
                  alpha=0.1, beta=0.0, gamma=0.0):
    """Plain-JAX reference mirroring the PyTorch per-batch loop (f32 inputs)."""
    B, T = accident_scores.shape
    losses = []
    for b in range(B):
        s = accident_scores[b]
        y = labels[b]
        u_t = 1.0 - uncertainty[b] ** 2
        w = jnp.exp(-alpha * time_to_accident[b])
        bce = -(y * jnp.maximum(jnp.log(s), -100.0)
                + (1.0 - y) * jnp.maximum(jnp.log(1.0 - s), -100.0))
        l_exp = bce * (cls[b] * w + (1.0 - cls[b]))
        pos = y == 1.0
        neg = y == 0.0
        pos_cnt = jnp.sum(pos)
        neg_cnt = jnp.sum(neg)
        pos_mean = jnp.sum(jnp.where(pos, s, 0.0)) / jnp.maximum(pos_cnt, 1)
        neg_mean = jnp.sum(jnp.where(neg, s, 0.0)) / jnp.maximum(neg_cnt, 1)
        l_cont = jnp.where(jnp.logical_and(pos_cnt > 0, neg_cnt > 0),
                           (pos_mean - neg_mean) ** 2, 0.0)
        rewards = jnp.where(y == 1.0, 1.0, -1.0)
        l_rl = (-rewards * jnp.log(s + 1e-6)
                - (1.0 - rewards) * jnp.log(1.0 - s + 1e-6))
        losses.append(jnp.mean(u_t * (l_exp + beta * l_cont) + gamma * l_rl))
    return jnp.mean(jnp.stack(losses))


if __name__ == "__main__":
    B, T = 2, 8
    key = jax.random.PRNGKey(0)
    k1, k2, k3, k4, k5 = jax.random.split(key, 5)

    # Native storage dtypes: bf16 activations/labels/TTA, f32 per-video class.
    # (On memory-bound v5e, labels/cls could be int8 for another ~10%.)
    accident_scores = jax.nn.sigmoid(
        jax.random.normal(k1, (B, T), jnp.float32)).astype(jnp.bfloat16)
    uncertainty = jax.random.uniform(k2, (B, T), jnp.float32).astype(jnp.bfloat16)
    labels = (jax.random.uniform(k3, (B, T)) > 0.5).astype(jnp.bfloat16)
    time_to_accident = (jax.random.uniform(k4, (B, T), jnp.float32)
                        * 10.0).astype(jnp.bfloat16)
    cls = (jax.random.uniform(k5, (B,)) > 0.5).astype(jnp.float32)

    # Reference operates on the same bf16-rounded values widened to f32, so the
    # kernel's in-kernel cast reproduces identical f32 math.
    s32 = accident_scores.astype(jnp.float32)
    u32 = uncertainty.astype(jnp.float32)
    y32 = labels.astype(jnp.float32)
    t32 = time_to_accident.astype(jnp.float32)

    # Case 1: default config (beta=gamma=0) -> specialized fast path.
    loss0 = tugl_loss(accident_scores, uncertainty, labels, time_to_accident,
                      cls, alpha=0.1, beta=0.0, gamma=0.0)
    loss0 = jax.block_until_ready(loss0)
    ref0 = tugl_loss_ref(s32, u32, y32, t32, cls, alpha=0.1, beta=0.0, gamma=0.0)
    assert jnp.allclose(loss0, ref0, rtol=1e-5, atol=1e-5), (loss0, ref0)

    # Case 2: non-zero beta/gamma so all branches of the loss are exercised
    # (exact_logs=True keeps PyTorch-exact log semantics).
    alpha, beta, gamma = 0.1, 0.05, 0.02
    loss1 = tugl_loss(accident_scores, uncertainty, labels, time_to_accident,
                      cls, alpha=alpha, beta=beta, gamma=gamma, exact_logs=True)
    loss1 = jax.block_until_ready(loss1)
    ref1 = tugl_loss_ref(s32, u32, y32, t32, cls, alpha=alpha, beta=beta,
                         gamma=gamma)
    assert jnp.allclose(loss1, ref1, rtol=1e-5, atol=1e-5), (loss1, ref1)

    print("KERNEL_OK")
</pallas_src>

<mosaic_0001>
module attributes {stable_mosaic.version = 11 : i64} {
  func.func @_tugl_kernel(%arg0: i32, %arg1: memref<2x8xbf16, #tpu.memory_space<vmem>>, %arg2: memref<2x8xbf16, #tpu.memory_space<vmem>>, %arg3: memref<2x8xbf16, #tpu.memory_space<vmem>>, %arg4: memref<2x8xbf16, #tpu.memory_space<vmem>>, %arg5: memref<2x1xf32, #tpu.memory_space<vmem>>, %arg6: memref<1x8x128xf32, #tpu.memory_space<vmem>>) attributes {dimension_semantics = [#tpu.dimension_semantics<parallel>], iteration_bounds = array<i64: 1>, scalar_prefetch = 0 : i64, scratch_operands = 0 : i64, tpu.core_type = #tpu.core_type<tc>, window_params = [{transform_indices = @transform_0, window_bounds = array<i64: 2, 8>}, {transform_indices = @transform_1, window_bounds = array<i64: 2, 8>}, {transform_indices = @transform_2, window_bounds = array<i64: 2, 8>}, {transform_indices = @transform_3, window_bounds = array<i64: 2, 8>}, {transform_indices = @transform_4, window_bounds = array<i64: 2, 1>}, {transform_indices = @transform_5, window_bounds = array<i64: 1, 8, 128>}]} {
    %c0 = arith.constant 0 : index
    %c0_0 = arith.constant 0 : index
    %0 = vector.load %arg1[%c0, %c0_0] : memref<2x8xbf16, #tpu.memory_space<vmem>>, vector<2x8xbf16>
    %1 = arith.extf %0 : vector<2x8xbf16> to vector<2x8xf32>
    %c0_1 = arith.constant 0 : index
    %c0_2 = arith.constant 0 : index
    %2 = vector.load %arg2[%c0_1, %c0_2] : memref<2x8xbf16, #tpu.memory_space<vmem>>, vector<2x8xbf16>
    %3 = arith.extf %2 : vector<2x8xbf16> to vector<2x8xf32>
    %c0_3 = arith.constant 0 : index
    %c0_4 = arith.constant 0 : index
    %4 = vector.load %arg3[%c0_3, %c0_4] : memref<2x8xbf16, #tpu.memory_space<vmem>>, vector<2x8xbf16>
    %5 = arith.extf %4 : vector<2x8xbf16> to vector<2x8xf32>
    %c0_5 = arith.constant 0 : index
    %c0_6 = arith.constant 0 : index
    %6 = vector.load %arg4[%c0_5, %c0_6] : memref<2x8xbf16, #tpu.memory_space<vmem>>, vector<2x8xbf16>
    %7 = arith.extf %6 : vector<2x8xbf16> to vector<2x8xf32>
    %c0_7 = arith.constant 0 : index
    %c0_8 = arith.constant 0 : index
    %8 = vector.load %arg5[%c0_7, %c0_8] : memref<2x1xf32, #tpu.memory_space<vmem>>, vector<2x1xf32>
    %cst = arith.constant 1.000000e+00 : f32
    %9 = vector.broadcast %cst : f32 to vector<2x8xf32>
    %10 = arith.subf %9, %5 : vector<2x8xf32>
    %cst_9 = arith.constant 1.000000e+00 : f32
    %11 = vector.broadcast %cst_9 : f32 to vector<2x8xf32>
    %12 = arith.subf %11, %1 : vector<2x8xf32>
    %13 = arith.mulf %3, %3 : vector<2x8xf32>
    %cst_10 = arith.constant 1.000000e+00 : f32
    %14 = vector.broadcast %cst_10 : f32 to vector<2x8xf32>
    %15 = arith.subf %14, %13 : vector<2x8xf32>
    %cst_11 = arith.constant -1.000000e-01 : f32
    %16 = vector.broadcast %cst_11 : f32 to vector<2x8xf32>
    %17 = arith.mulf %16, %7 : vector<2x8xf32>
    %18 = math.exp %17 : vector<2x8xf32>
    %19 = math.log %1 : vector<2x8xf32>
    %cst_12 = arith.constant -1.000000e+02 : f32
    %20 = vector.broadcast %cst_12 : f32 to vector<2x8xf32>
    %21 = arith.maximumf %19, %20 : vector<2x8xf32>
    %22 = math.log %12 : vector<2x8xf32>
    %cst_13 = arith.constant -1.000000e+02 : f32
    %23 = vector.broadcast %cst_13 : f32 to vector<2x8xf32>
    %24 = arith.maximumf %22, %23 : vector<2x8xf32>
    %25 = arith.mulf %5, %21 : vector<2x8xf32>
    %26 = arith.mulf %10, %24 : vector<2x8xf32>
    %27 = arith.addf %25, %26 : vector<2x8xf32>
    %cst_14 = arith.constant 0.000000e+00 : f32
    %28 = vector.broadcast %cst_14 : f32 to vector<2x8xf32>
    %29 = arith.subf %28, %27 : vector<2x8xf32>
    %30 = vector.broadcast %8 : vector<2x1xf32> to vector<2x8xf32>
    %31 = arith.mulf %30, %18 : vector<2x8xf32>
    %cst_15 = arith.constant 1.000000e+00 : f32
    %32 = vector.broadcast %cst_15 : f32 to vector<2x1xf32>
    %33 = arith.subf %32, %8 : vector<2x1xf32>
    %34 = vector.broadcast %33 : vector<2x1xf32> to vector<2x8xf32>
    %35 = arith.addf %31, %34 : vector<2x8xf32>
    %36 = arith.mulf %29, %35 : vector<2x8xf32>
    %37 = arith.mulf %15, %36 : vector<2x8xf32>
    %cst_16 = arith.constant dense<0.000000e+00> : vector<2xf32>
    %38 = vector.multi_reduction <add>, %37, %cst_16 [1] : vector<2x8xf32> to vector<2xf32>
    %39 = vector.shape_cast %38 : vector<2xf32> to vector<2x1xf32>
    %cst_17 = arith.constant 1.250000e-01 : f32
    %40 = vector.broadcast %cst_17 : f32 to vector<2x1xf32>
    %41 = arith.mulf %39, %40 : vector<2x1xf32>
    %c2_i32 = arith.constant 2 : i32
    %42 = arith.muli %arg0, %c2_i32 : i32
    %43 = tpu.iota {dimensions = array<i32: 0>} : vector<2x1xi32>
    %44 = vector.broadcast %42 : i32 to vector<2x1xi32>
    %45 = arith.addi %44, %43 : vector<2x1xi32>
    %c2_i32_18 = arith.constant 2 : i32
    %46 = vector.broadcast %c2_i32_18 : i32 to vector<2x1xi32>
    %47 = arith.cmpi slt, %45, %46 : vector<2x1xi32>
    %cst_19 = arith.constant 0.000000e+00 : f32
    %48 = vector.broadcast %cst_19 : f32 to vector<2x1xf32>
    %49 = arith.select %47, %41, %48 : vector<2x1xi1>, vector<2x1xf32>
    %50 = vector.shape_cast %49 : vector<2x1xf32> to vector<1x2x1xf32>
    %cst_20 = arith.constant dense<0.000000e+00> : vector<1xf32>
    %51 = vector.multi_reduction <add>, %50, %cst_20 [1, 2] : vector<1x2x1xf32> to vector<1xf32>
    %52 = vector.shape_cast %51 : vector<1xf32> to vector<1x1x1xf32>
    %53 = vector.extract %52[0, 0, 0] : f32 from vector<1x1x1xf32>
    %54 = tpu.iota {dimensions = array<i32: 0>} : vector<8x128xi32>
    %55 = tpu.iota {dimensions = array<i32: 1>} : vector<8x128xi32>
    %c0_i32 = arith.constant 0 : i32
    %56 = vector.broadcast %c0_i32 : i32 to vector<8x128xi32>
    %57 = arith.cmpi eq, %54, %56 : vector<8x128xi32>
    %c0_i32_21 = arith.constant 0 : i32
    %58 = vector.broadcast %c0_i32_21 : i32 to vector<8x128xi32>
    %59 = arith.cmpi eq, %55, %58 : vector<8x128xi32>
    %60 = arith.andi %57, %59 : vector<8x128xi1>
    %cst_22 = arith.constant 0.000000e+00 : f32
    %61 = vector.broadcast %53 : f32 to vector<8x128xf32>
    %62 = vector.broadcast %cst_22 : f32 to vector<8x128xf32>
    %63 = arith.select %60, %61, %62 : vector<8x128xi1>, vector<8x128xf32>
    %c0_23 = arith.constant 0 : index
    %c0_24 = arith.constant 0 : index
    %c0_25 = arith.constant 0 : index
    %64 = vector.load %arg6[%c0_23, %c0_24, %c0_25] : memref<1x8x128xf32, #tpu.memory_space<vmem>>, vector<1x8x128xf32>
    %65 = vector.shape_cast %64 : vector<1x8x128xf32> to vector<8x128xf32>
    %66 = vector.shape_cast %63 : vector<8x128xf32> to vector<1x8x128xf32>
    tpu.vector_store %arg6[%c0_23, %c0_24, %c0_25], %66 {strides = array<i32>} : memref<1x8x128xf32, #tpu.memory_space<vmem>>, vector<1x8x128xf32>,
    return
  }
  func.func @transform_0(%arg0: i32) -> (i32, i32) {
    %c0_i32 = arith.constant 0 : i32
    %c0_i32_0 = arith.constant 0 : i32
    return %arg0, %c0_i32 : i32, i32
  }
  func.func @transform_1(%arg0: i32) -> (i32, i32) {
    %c0_i32 = arith.constant 0 : i32
    %c0_i32_0 = arith.constant 0 : i32
    return %arg0, %c0_i32 : i32, i32
  }
  func.func @transform_2(%arg0: i32) -> (i32, i32) {
    %c0_i32 = arith.constant 0 : i32
    %c0_i32_0 = arith.constant 0 : i32
    return %arg0, %c0_i32 : i32, i32
  }
  func.func @transform_3(%arg0: i32) -> (i32, i32) {
    %c0_i32 = arith.constant 0 : i32
    %c0_i32_0 = arith.constant 0 : i32
    return %arg0, %c0_i32 : i32, i32
  }
  func.func @transform_4(%arg0: i32) -> (i32, i32) {
    %c0_i32 = arith.constant 0 : i32
    %c0_i32_0 = arith.constant 0 : i32
    return %arg0, %c0_i32 : i32, i32
  }
  func.func @transform_5(%arg0: i32) -> (i32, i32, i32) {
    %c0_i32 = arith.constant 0 : i32
    %c0_i32_0 = arith.constant 0 : i32
    %c0_i32_1 = arith.constant 0 : i32
    return %arg0, %c0_i32, %c0_i32_0 : i32, i32, i32
  }
}

</mosaic_0001>

<llo_original>
// kernel: tpu_custom_call.1
$region0: #{tpu_custom_call.1}
  #allocation0 [shape = 'u32[]', space=smem, size = 0x4, offset = 0x4, fixed_abs, tag = 'smem constant byte address 0x4 - core index']
  #allocation1 [shape = 'u32[144,128]{1,0:T(1,128)}', space=vmem, size = 0x12000, scoped, tag = 'internal scratch']
  %s0 = inlined_call_operand.hbm [shape: bf16[2,8], index: 0, kind: input, shape index: {}]
  %s1 = inlined_call_operand.hbm [shape: bf16[2,8], index: 1, kind: input, shape index: {}]
  %s2 = inlined_call_operand.hbm [shape: bf16[2,8], index: 2, kind: input, shape index: {}]
  %s3 = inlined_call_operand.hbm [shape: bf16[2,8], index: 3, kind: input, shape index: {}]
  %s4 = inlined_call_operand.hbm [shape: f32[2,1], index: 4, kind: input, shape index: {}]
  %s5 = inlined_call_operand.hbm [shape: f32[1,8,128], index: 5, kind: output, shape index: {}]
  %s6 = sld [smem:[#allocation0]]
  $region50: #{tpu_custom_call.1} parent=0
    _
  %s8 = ssub.s32 1, %s6
  %s9 = scalar_select 0, %s8, %s6
  $region1: #{tpu_custom_call.1} parent=0
    #allocation2 [shape = 'u8[512]{0}', space=vmem, size = 0x400, scoped, tag = 'input window, operand 0, single buffered']
    #allocation3 [shape = 's32[1]{0}', space=sflag, size = 0x4, scoped, tag = 'scoped memory for tpu_custom_call.1']
    #allocation4 [shape = 's32[1]{0}', space=sflag, size = 0x4, scoped, tag = 'scoped memory for tpu_custom_call.1']
    #allocation5 [shape = 'u8[512]{0}', space=vmem, size = 0x400, scoped, tag = 'input window, operand 1, single buffered']
    #allocation6 [shape = 's32[1]{0}', space=sflag, size = 0x4, scoped, tag = 'scoped memory for tpu_custom_call.1']
    #allocation7 [shape = 'u8[512]{0}', space=vmem, size = 0x400, scoped, tag = 'input window, operand 2, single buffered']
    #allocation8 [shape = 'u8[512]{0}', space=vmem, size = 0x400, scoped, tag = 'input window, operand 3, single buffered']
    #allocation9 [shape = 's32[1]{0}', space=sflag, size = 0x4, scoped, tag = 'scoped memory for tpu_custom_call.1']
    #allocation10 [shape = 'u8[1024]{0}', space=vmem, size = 0x400, scoped, tag = 'input window, operand 4, single buffered']
    #allocation11 [shape = 'u8[4096]{0}', space=vmem, size = 0x1000, scoped, tag = 'output window, operand 0, single buffered']
    %10 = vsyncpa [#allocation3], 0
    %11 = vsyncpa [#allocation6], 0
    %12 = vsyncpa [#allocation9], 0
    %13 = vsyncpa [#allocation4], 0
    // Predicated region
    $region2: #{tpu_custom_call.1} parent=1 // pred_check
      _
    $region3: #{tpu_custom_call.1} parent=1 // pred_check_branch
      %15 = sbr.rel (0) target = $region5
    $region4: #{tpu_custom_call.1} parent=1 // pred_region
      %s17 = ssub.s32 16, 16
      %18 = vsyncadd [#allocation3], %s17
      %s20 = sshll.u32 [#allocation2], 4
      %s21 = int_to_ptr.vmem [resolvable:$true] %s20
      %23 = dma.hbm_to_vmem [thread:$0]  %s0, 16, %s21, [#allocation3]
    $region5: #{tpu_custom_call.1} parent=1 // pred_fallthru
      _
    // Predicated region
    $region6: #{tpu_custom_call.1} parent=1 // pred_check
      _
    $region7: #{tpu_custom_call.1} parent=1 // pred_check_branch
      %25 = sbr.rel (0) target = $region9
    $region8: #{tpu_custom_call.1} parent=1 // pred_region
      %s27 = ssub.s32 16, 16
      %28 = vsyncadd [#allocation6], %s27
      %s30 = sshll.u32 [#allocation5], 4
      %s31 = int_to_ptr.vmem [resolvable:$true] %s30
      %33 = dma.hbm_to_vmem [thread:$0]  %s1, 16, %s31, [#allocation6]
    $region9: #{tpu_custom_call.1} parent=1 // pred_fallthru
      _
    // Predicated region
    $region10: #{tpu_custom_call.1} parent=1 // pred_check
      _
    $region11: #{tpu_custom_call.1} parent=1 // pred_check_branch
      %35 = sbr.rel (0) target = $region13
    $region12: #{tpu_custom_call.1} parent=1 // pred_region
      %s37 = ssub.s32 16, 16
      %38 = vsyncadd [#allocation6], %s37
      %s40 = sshll.u32 [#allocation7], 4
      %s41 = int_to_ptr.vmem [resolvable:$true] %s40
      %43 = dma.hbm_to_vmem [thread:$0]  %s2, 16, %s41, [#allocation6]
    $region13: #{tpu_custom_call.1} parent=1 // pred_fallthru
      _
    // Predicated region
    $region14: #{tpu_custom_call.1} parent=1 // pred_check
      _
    $region15: #{tpu_custom_call.1} parent=1 // pred_check_branch
      %45 = sbr.rel (0) target = $region17
    $region16: #{tpu_custom_call.1} parent=1 // pred_region
      %s47 = ssub.s32 16, 16
      %48 = vsyncadd [#allocation9], %s47
      %s50 = sshll.u32 [#allocation8], 4
      %s51 = int_to_ptr.vmem [resolvable:$true] %s50
      %53 = dma.hbm_to_vmem [thread:$0]  %s3, 16, %s51, [#allocation9]
    $region17: #{tpu_custom_call.1} parent=1 // pred_fallthru
      _
    // Predicated region
    $region18: #{tpu_custom_call.1} parent=1 // pred_check
      _
    $region19: #{tpu_custom_call.1} parent=1 // pred_check_branch
      %55 = sbr.rel (0) target = $region21
    $region20: #{tpu_custom_call.1} parent=1 // pred_region
      %s57 = ssub.s32 32, 32
      %58 = vsyncadd [#allocation9], %s57
      %s60 = sshll.u32 [#allocation10], 4
      %s61 = int_to_ptr.vmem [resolvable:$true] %s60
      %63 = dma.hbm_to_vmem [thread:$0]  %s4, 32, %s61, [#allocation9]
    $region21: #{tpu_custom_call.1} parent=1 // pred_fallthru
      _
    // Predicated region
    $region22: #{tpu_custom_call.1} parent=1 // pred_check
      _
    $region23: #{tpu_custom_call.1} parent=1 // pred_check_branch
      %65 = sbr.rel (0) target = $region25
    $region24: #{tpu_custom_call.1} parent=1 // pred_region
      %66 = dma.done [#allocation3], 16
    $region25: #{tpu_custom_call.1} parent=1 // pred_fallthru
      _
    // Predicated region
    $region26: #{tpu_custom_call.1} parent=1 // pred_check
      _
    $region27: #{tpu_custom_call.1} parent=1 // pred_check_branch
      %68 = sbr.rel (0) target = $region29
    $region28: #{tpu_custom_call.1} parent=1 // pred_region
      %69 = dma.done [#allocation6], 16
    $region29: #{tpu_custom_call.1} parent=1 // pred_fallthru
      _
    // Predicated region
    $region30: #{tpu_custom_call.1} parent=1 // pred_check
      _
    $region31: #{tpu_custom_call.1} parent=1 // pred_check_branch
      %71 = sbr.rel (0) target = $region33
    $region32: #{tpu_custom_call.1} parent=1 // pred_region
      %72 = dma.done [#allocation6], 16
    $region33: #{tpu_custom_call.1} parent=1 // pred_fallthru
      _
    // Predicated region
    $region34: #{tpu_custom_call.1} parent=1 // pred_check
      _
    $region35: #{tpu_custom_call.1} parent=1 // pred_check_branch
      %74 = sbr.rel (0) target = $region37
    $region36: #{tpu_custom_call.1} parent=1 // pred_region
      %75 = dma.done [#allocation9], 16
    $region37: #{tpu_custom_call.1} parent=1 // pred_fallthru
      _
    // Predicated region
    $region38: #{tpu_custom_call.1} parent=1 // pred_check
      _
    $region39: #{tpu_custom_call.1} parent=1 // pred_check_branch
      %77 = sbr.rel (0) target = $region41
    $region40: #{tpu_custom_call.1} parent=1 // pred_region
      %78 = dma.done [#allocation9], 32
    $region41: #{tpu_custom_call.1} parent=1 // pred_fallthru
      _
    %v79 = vld [vmem:[#allocation2] sm:$0x1]
    %v80 = vunpack.c.l.bf16 %v79
    %v81 = vld [vmem:[#allocation5] sm:$0x1]
    %v82 = vunpack.c.l.bf16 %v81
    %v83 = vld [vmem:[#allocation7] sm:$0x1]
    %v84 = vunpack.c.l.bf16 %v83
    %v85 = vld [vmem:[#allocation8] sm:$0x1]
    %v86 = vunpack.c.l.bf16 %v85
    %v87 = vld [vmem:[#allocation10] sm:$0x3]
    %v88 = vsub.f32 1.0, %v84
    %v89 = vsub.f32 1.0, %v80
    %v90 = vmul.f32 %v82, %v82
    %v91 = vsub.f32 1.0, %v90
    %v92 = vmul.f32 %v86, -0.1
    %v93 = vmul.f32 %v92, 1.442695
    %v94 = vpow.pop %v93
    %v95 = vlog2.pop %v80
    %v96 = vmul.f32 %v95, 0.6931472
    %v97 = vmax.f32 %v96, -100.0
    %v98 = vlog2.pop %v89
    %v99 = vmul.f32 %v98, 0.6931472
    %v100 = vmax.f32 %v99, -100.0
    %v101 = vmul.f32 %v84, %v97
    %v102 = vmul.f32 %v88, %v100
    %v103 = vadd.f32 %v101, %v102
    %v104 = vsub.f32 0.0, %v103
    %106 = vset.pattern.permute.xlu0 0
    %107 = vperm.xlu0 %106, %v87
    %v108 = vpop.permute.xlu0 %107
    %v110 = vmul.f32 %v108, %v94
    %v111 = vsub.f32 1.0, %v87
    %113 = vset.pattern.permute.xlu0 0
    %114 = vperm.xlu0 %113, %v111
    %v115 = vpop.permute.xlu0 %114
    %v117 = vadd.f32 %v110, %v115
    %v118 = vmul.f32 %v104, %v117
    %v119 = vmul.f32 %v91, %v118
    %vm120 = vcmask 58368
    %v121 = vsel %vm120, %v119, 0.0
    %122 = vadd.xlane.f32.xlu0 %v121
    %v123 = vpop.xlane.xlu0 %122
    %v124 = vmul.f32 %v123, 0.125
    %s125 = smul.u32 0, 2
    %v126 = vlaneseq
    %v127 = vshrl.u32 %v126, 7
    %v128 = vstv %s125
    %v129 = vadd.s32 %v128, %v127
    %vm130 = vcmp.lt.s32.totalorder %v129, 2
    %v131 = vsel %vm130, %v124, 0.0
    %vm132 = vcmask 1024
    %v133 = vsel %vm132, %v131, 0.0
    %134 = vadd.xlane.f32.xlu0 %v133
    %v135 = vpop.xlane.xlu0 %134
    %v136 = vrot.slane %v135, 4
    %v137 = vadd.f32 %v135, %v136
    %v138 = vrot.slane %v137, 2
    %v139 = vadd.f32 %v137, %v138
    %v140 = vrot.slane %v139, 1
    %v141 = vadd.f32 %v139, %v140
    %s142 = vtos %v141
    %v143 = vlaneseq
    %v144 = vand.u32 %v143, 127
    %vm145 = vcmp.eq.s32.totalorder %v127, 0
    %vm146 = vcmp.eq.s32.totalorder %v144, 0
    %vm147 = vmand %vm145, %vm146
    %v148 = vstv %s142
    %v149 = vsel %vm147, %v148, 0.0
    %150 = vst [vmem:[#allocation11] sm:$0xff] %v149
    // Predicated region
    $region42: #{tpu_custom_call.1} parent=1 // pred_check
      _
    $region43: #{tpu_custom_call.1} parent=1 // pred_check_branch
      %152 = sbr.rel (0) target = $region45
    $region44: #{tpu_custom_call.1} parent=1 // pred_region
      %s154 = ssub.s32 128, 128
      %155 = vsyncadd [#allocation4], %s154
      %s157 = sshll.u32 [#allocation11], 4
      %s158 = int_to_ptr.vmem [resolvable:$true] %s157
      %160 = dma.vmem_to_hbm [thread:$0]  %s158, 128, %s5, [#allocation4]
    $region45: #{tpu_custom_call.1} parent=1 // pred_fallthru
      _
    // Predicated region
    $region46: #{tpu_custom_call.1} parent=1 // pred_check
      _
    $region47: #{tpu_custom_call.1} parent=1 // pred_check_branch
      %162 = sbr.rel (0) target = $region49
    $region48: #{tpu_custom_call.1} parent=1 // pred_region
      %163 = dma.done [#allocation4], 128
    $region49: #{tpu_custom_call.1} parent=1 // pred_fallthru
      _
    %164 = vsyncpa [#allocation3], 1
    %165 = vsyncpa [#allocation6], 1
    %166 = vsyncpa [#allocation9], 1
    %167 = vsyncpa [#allocation4], 1

</llo_original>
